<compile_context>
chip_gen: v6e
topology: v6e:2x2x1
jax: 0.10.0
libtpu: 0.0.40
codegen_flags: <defaults>
</compile_context>

<pallas_src>
import jax
import jax.numpy as jnp
from jax import lax
from jax.experimental import pallas as pl
from jax.experimental.pallas import tpu as pltpu


def _cdiv(a, b):
    return -(-a // b)


# ----------------------------------------------------------------------------
# Kernel
# ----------------------------------------------------------------------------
def _residual_block_kernel(x_ref, w1_ref, b1_ref, w2_ref, b2_ref, out_ref,
                           pad_ref):
    """One grid step processes BN images.

    x_ref   : (BN, NG, GWC)       input, NG = H/G row-groups, GWC = G*W*C lanes
    w1_ref  : (3, GWC, GWC)       grouped banded conv1 weights (prev/self/next)
    b1_ref  : (1, GWC)            conv1 bias tiled over G*W (float32)
    w2_ref  : (3, GWC, GWC)       grouped banded conv2 weights
    b2_ref  : (1, GWC)            conv2 bias tiled over G*W (float32)
    out_ref : (BN, NG, GWC)
    pad_ref : VMEM (BN, NG+2, GWC) scratch shared by conv1 / conv2 (group halo)
    """
    BN, NG, GWC = x_ref.shape

    # Zero only the two halo groups.  Done every step (not once under pl.when):
    # with dimension_semantics=("parallel",) each TensorCore has its own
    # scratch and may never execute program_id == 0.  Cost is negligible.
    zgrp = jnp.zeros((BN, 1, GWC), pad_ref.dtype)
    pad_ref[:, 0:1, :] = zgrp
    pad_ref[:, NG + 1:NG + 2, :] = zgrp

    def conv3x3(w_ref, b_ref):
        # Bias folded into the accumulator init (hoisted out of the tap loop).
        acc = jnp.broadcast_to(b_ref[...], (BN * NG, GWC)).astype(jnp.float32)
        for j in range(3):                    # static unroll: 3 MXU pushes
            patch = pad_ref[:, j:j + NG, :].reshape(BN * NG, GWC)
            acc = acc + jnp.dot(patch, w_ref[j],
                                preferred_element_type=jnp.float32)
        return acc

    # ---- conv1 + ReLU ----
    pad_ref[:, 1:NG + 1, :] = x_ref[...]
    hidden = jnp.maximum(conv3x3(w1_ref, b1_ref), 0.0)

    # ---- conv2 (reuse the same padded scratch; halo groups are still zero) --
    pad_ref[:, 1:NG + 1, :] = hidden.reshape(BN, NG, GWC).astype(pad_ref.dtype)
    acc2 = conv3x3(w2_ref, b2_ref)

    # ---- residual add from the *unpadded* input block + final ReLU ----
    res = x_ref[...].reshape(BN * NG, GWC).astype(jnp.float32)
    out_ref[...] = jnp.maximum(acc2 + res, 0.0).reshape(BN, NG, GWC).astype(
        out_ref.dtype)


# ----------------------------------------------------------------------------
# Weight banding
# ----------------------------------------------------------------------------
def _band_weights(w_hwio, W):
    """(3, 3, Cin, Cout) HWIO -> (3, W*Cin, W*Cout) banded matrices (per ky).

    Row index = w_in*Cin + ci, column index = w_out*Cout + co.  The kx tap and
    the W-boundary zero padding are folded into the band structure.
    """
    _, _, Cin, Cout = w_hwio.shape
    mats = []
    for ky in range(3):
        acc = jnp.zeros((W * Cin, W * Cout), w_hwio.dtype)
        for kx in range(3):
            # band[w_in, w_out] = 1  iff  w_in == w_out + (kx - 1)
            band = jnp.eye(W, k=1 - kx, dtype=w_hwio.dtype)
            acc = acc + jnp.einsum('ab,ic->aibc', band,
                                   w_hwio[ky, kx]).reshape(W * Cin, W * Cout)
        mats.append(acc)
    return jnp.stack(mats)


def _group_band_weights(w_hwio, W, G):
    """(3,3,Cin,Cout) HWIO -> (3, G*W*Cin, G*W*Cout) grouped banded matrices.

    Index 0 acts on the previous row-group, 1 on the same group, 2 on the next
    group.  Output row r_out (0..G-1) and tap ky touch input local row
    m = r_out - 1 + ky; m == -1 -> last row of prev group, m == G -> first row
    of next group.  Folding ky into the band makes K = N = G*W*C per matmul.
    """
    band = _band_weights(w_hwio, W)               # (3, W*Cin, W*Cout)
    _, _, Cin, Cout = w_hwio.shape
    WCi, WCo = W * Cin, W * Cout
    prev = jnp.zeros((G * WCi, G * WCo), band.dtype)
    self_ = jnp.zeros_like(prev)
    nxt = jnp.zeros_like(prev)
    for r_out in range(G):
        c0, c1 = r_out * WCo, (r_out + 1) * WCo
        for ky in range(3):
            m = r_out - 1 + ky
            blk = band[ky]
            if m < 0:
                prev = prev.at[(G - 1) * WCi:G * WCi, c0:c1].add(blk)
            elif m >= G:
                nxt = nxt.at[0:WCi, c0:c1].add(blk)
            else:
                self_ = self_.at[m * WCi:(m + 1) * WCi, c0:c1].add(blk)
    return jnp.stack([prev, self_, nxt])


# ----------------------------------------------------------------------------
# Generation-aware sizing heuristics
# ----------------------------------------------------------------------------
def _tpu_config():
    """MXU width target, VMEM budget/limit and grid policy per TPU generation."""
    try:
        kind = jax.devices()[0].device_kind.lower()
    except Exception:
        kind = ""
    if "v7" in kind:                       # 64 MiB VMEM, 256-wide MXU, 2 TCs
        return dict(target_lanes=256, vmem_budget=32 << 20,
                    vmem_limit=48 << 20, prefer_multi_step=True)
    if "v6" in kind:                       # 128 MiB VMEM, 256-wide MXU
        return dict(target_lanes=256, vmem_budget=64 << 20,
                    vmem_limit=96 << 20, prefer_multi_step=False)
    if "v5e" in kind or ("v5" in kind and "lite" in kind):
        return dict(target_lanes=128, vmem_budget=64 << 20,   # 128-wide MXU
                    vmem_limit=96 << 20, prefer_multi_step=False)
    # v5p / v4 / unknown: conservative, rely on the compiler default limit.
    return dict(target_lanes=128, vmem_budget=40 << 20,
                vmem_limit=None, prefer_multi_step=False)


def _pick_group(H, WC, target_lanes):
    """Smallest divisor G of H with G*W*C >= target_lanes (capped so the
    (G*W*C)^2 banded weights stay small); falls back to the largest divisor
    under the cap (G=1 reproduces the plain row-band kernel)."""
    cap = max(2 * target_lanes, WC)
    best = 1
    for g in range(1, H + 1):
        if H % g:
            continue
        if g * WC <= cap:
            best = g
        if g * WC >= target_lanes:
            break
    return best


def _pick_batch_block(N, NG, GWC, in_item, out_item, w_item, cfg):
    """Batch block size: big enough for M = BN*NG ~ 256 MXU rows, small enough
    to fit the (properly accounted) VMEM budget, capped so zero-padding the
    batch never costs more than ~2x, and (v7x) yielding >= 2 grid steps."""
    per_img = (2 * NG * GWC * in_item        # double-buffered input block
               + 2 * NG * GWC * out_item     # double-buffered output block
               + (NG + 2) * GWC * in_item    # padded halo scratch
               + 2 * NG * GWC * 4)           # f32 hidden + accumulator values
    fixed = (2 * 2 * 3 * GWC * GWC * w_item  # two weight tensors, dbl-buffered
             + (2 << 20))                    # compiler scratch margin
    cap = max(1, (cfg["vmem_budget"] - fixed) // per_img)
    target_m = 256                           # rows per MXU push per grid step
    bn = max(1, min(int(cap), _cdiv(target_m, NG)))
    bn = min(bn, max(1, 2 * N))              # cap batch-padding overhead ~2x
    if cfg["prefer_multi_step"]:
        # v7x: 2 TensorCores per chip -> make sure the grid has >= 2 steps.
        while bn > 1 and _cdiv(N, bn) < 2:
            bn = _cdiv(bn, 2)
    return int(bn)


# ----------------------------------------------------------------------------
# Wrapper
# ----------------------------------------------------------------------------
def residual_block(x_nchw, w1_oihw, b1, w2_oihw, b2,
                   compute_dtype=jnp.float32):
    """x_nchw: (N, C, H, W) float32. Weights in PyTorch OIHW layout.

    Pass compute_dtype=jnp.bfloat16 on v6e/v7x to cut HBM/VMEM traffic and use
    the native bf16 MXU path (f32 accumulation preserved; output also bf16).
    """
    N, C, H, W = x_nchw.shape
    Cout = w1_oihw.shape[0]
    assert C == Cout, "residual add requires in_channels == out_channels"
    WC = W * C

    cfg = _tpu_config()
    G = _pick_group(H, WC, cfg["target_lanes"])
    NG = H // G
    GWC = G * WC

    # Glue (wrapper-side, contiguous -> free): NCHW -> NHWC -> (N, H/G, G*W*C)
    x = jnp.transpose(x_nchw, (0, 2, 3, 1)).reshape(N, NG, GWC)
    x = x.astype(compute_dtype)
    w1 = jnp.transpose(w1_oihw, (2, 3, 1, 0)).astype(jnp.float32)   # HWIO
    w2 = jnp.transpose(w2_oihw, (2, 3, 1, 0)).astype(jnp.float32)
    w1g = _group_band_weights(w1, W, G).astype(compute_dtype)       # (3,GWC,GWC)
    w2g = _group_band_weights(w2, W, G).astype(compute_dtype)
    b1t = jnp.tile(b1.astype(jnp.float32), G * W).reshape(1, GWC)
    b2t = jnp.tile(b2.astype(jnp.float32), G * W).reshape(1, GWC)

    # bf16 compute -> bf16 output (largest single HBM stream); f32 otherwise.
    out_dtype = jnp.float32 if compute_dtype == jnp.float32 else compute_dtype

    in_item = jnp.dtype(compute_dtype).itemsize
    out_item = jnp.dtype(out_dtype).itemsize
    BN = _pick_batch_block(N, NG, GWC, in_item, out_item, in_item, cfg)

    # Zero-pad the batch to a multiple of BN (no divisor restriction).
    Np = _cdiv(N, BN) * BN
    if Np != N:
        x = jnp.concatenate(
            [x, jnp.zeros((Np - N, NG, GWC), x.dtype)], axis=0)
    grid = (Np // BN,)

    cp_kwargs = dict(dimension_semantics=("parallel",))
    if cfg["vmem_limit"] is not None:
        cp_kwargs["vmem_limit_bytes"] = cfg["vmem_limit"]

    out = pl.pallas_call(
        _residual_block_kernel,
        out_shape=jax.ShapeDtypeStruct((Np, NG, GWC), out_dtype),
        grid_spec=pltpu.PrefetchScalarGridSpec(
            num_scalar_prefetch=0,
            grid=grid,
            in_specs=[
                pl.BlockSpec((BN, NG, GWC), lambda n: (n, 0, 0)),
                pl.BlockSpec((3, GWC, GWC), lambda n: (0, 0, 0)),
                pl.BlockSpec((1, GWC), lambda n: (0, 0)),
                pl.BlockSpec((3, GWC, GWC), lambda n: (0, 0, 0)),
                pl.BlockSpec((1, GWC), lambda n: (0, 0)),
            ],
            out_specs=pl.BlockSpec((BN, NG, GWC), lambda n: (n, 0, 0)),
            scratch_shapes=[pltpu.VMEM((BN, NG + 2, GWC), compute_dtype)],
        ),
        compiler_params=pltpu.CompilerParams(**cp_kwargs),
    )(x, w1g, b1t, w2g, b2t)

    # Drop batch padding and glue back to NCHW (PyTorch output convention).
    out = out[:N].astype(jnp.float32)
    return jnp.transpose(out.reshape(N, H, W, C), (0, 3, 1, 2))


# ----------------------------------------------------------------------------
# Reference + self-test
# ----------------------------------------------------------------------------
def _reference(x, w1, b1, w2, b2):
    """Pure-JAX reference using lax.conv (NCHW / OIHW)."""
    dn = ("NCHW", "OIHW", "NCHW")
    y = lax.conv_general_dilated(x, w1, (1, 1), [(1, 1), (1, 1)],
                                 dimension_numbers=dn)
    y = jnp.maximum(y + b1.reshape(1, -1, 1, 1), 0.0)
    y = lax.conv_general_dilated(y, w2, (1, 1), [(1, 1), (1, 1)],
                                 dimension_numbers=dn)
    y = y + b2.reshape(1, -1, 1, 1)
    return jnp.maximum(y + x, 0.0)


if __name__ == "__main__":
    N, C, H, W = 2, 4, 16, 16   # in_channels == out_channels == 4

    key = jax.random.PRNGKey(0)
    kx, kw1, kb1, kw2, kb2 = jax.random.split(key, 5)

    x = jax.random.normal(kx, (N, C, H, W), jnp.float32)
    # deterministic synthetic parameters (shapes from nn.Conv2d(C, C, 3, 1, 1))
    w1 = 0.1 * jax.random.normal(kw1, (C, C, 3, 3), jnp.float32)
    b1 = 0.1 * jax.random.normal(kb1, (C,), jnp.float32)
    w2 = 0.1 * jax.random.normal(kw2, (C, C, 3, 3), jnp.float32)
    b2 = 0.1 * jax.random.normal(kb2, (C,), jnp.float32)

    out = residual_block(x, w1, b1, w2, b2)
    out = jax.block_until_ready(out)

    ref = jax.block_until_ready(_reference(x, w1, b1, w2, b2))
    assert out.shape == (N, C, H, W)
    assert jnp.allclose(out, ref, atol=1e-4, rtol=1e-4), "mismatch vs reference"

    print("KERNEL_OK")
</pallas_src>

<mosaic_0001>
module attributes {stable_mosaic.version = 11 : i64} {
  func.func @_residual_block_kernel(%arg0: i32, %arg1: memref<4x8x128xf32, #tpu.memory_space<vmem>>, %arg2: memref<3x128x128xf32, #tpu.memory_space<vmem>>, %arg3: memref<1x128xf32, #tpu.memory_space<vmem>>, %arg4: memref<3x128x128xf32, #tpu.memory_space<vmem>>, %arg5: memref<1x128xf32, #tpu.memory_space<vmem>>, %arg6: memref<4x8x128xf32, #tpu.memory_space<vmem>>, %arg7: memref<4x10x128xf32, #tpu.memory_space<vmem>>) attributes {dimension_semantics = [#tpu.dimension_semantics<parallel>], iteration_bounds = array<i64: 1>, scalar_prefetch = 0 : i64, scratch_operands = 1 : i64, tpu.core_type = #tpu.core_type<tc>, window_params = [{transform_indices = @transform_0, window_bounds = array<i64: 4, 8, 128>}, {pipeline_mode = #tpu.pipeline_mode<synchronous>, transform_indices = @transform_1, window_bounds = array<i64: 3, 128, 128>}, {pipeline_mode = #tpu.pipeline_mode<synchronous>, transform_indices = @transform_2, window_bounds = array<i64: 1, 128>}, {pipeline_mode = #tpu.pipeline_mode<synchronous>, transform_indices = @transform_3, window_bounds = array<i64: 3, 128, 128>}, {pipeline_mode = #tpu.pipeline_mode<synchronous>, transform_indices = @transform_4, window_bounds = array<i64: 1, 128>}, {transform_indices = @transform_5, window_bounds = array<i64: 4, 8, 128>}]} {
    %cst = arith.constant 0.000000e+00 : f32
    %0 = vector.broadcast %cst : f32 to vector<4x1x128xf32>
    %c0 = arith.constant 0 : index
    %c0_0 = arith.constant 0 : index
    %c0_1 = arith.constant 0 : index
    %1 = vector.load %arg7[%c0, %c0_0, %c0_1] : memref<4x10x128xf32, #tpu.memory_space<vmem>>, vector<4x1x128xf32>
    tpu.vector_store %arg7[%c0, %c0_0, %c0_1], %0 {strides = array<i32>} : memref<4x10x128xf32, #tpu.memory_space<vmem>>, vector<4x1x128xf32>,
    %c0_2 = arith.constant 0 : index
    %c9 = arith.constant 9 : index
    %c0_3 = arith.constant 0 : index
    %2 = vector.load %arg7[%c0_2, %c9, %c0_3] : memref<4x10x128xf32, #tpu.memory_space<vmem>>, vector<4x1x128xf32>
    tpu.vector_store %arg7[%c0_2, %c9, %c0_3], %0 {strides = array<i32>} : memref<4x10x128xf32, #tpu.memory_space<vmem>>, vector<4x1x128xf32>,
    %c0_4 = arith.constant 0 : index
    %c0_5 = arith.constant 0 : index
    %c0_6 = arith.constant 0 : index
    %3 = vector.load %arg1[%c0_4, %c0_5, %c0_6] : memref<4x8x128xf32, #tpu.memory_space<vmem>>, vector<4x8x128xf32>
    %c0_7 = arith.constant 0 : index
    %c1 = arith.constant 1 : index
    %c0_8 = arith.constant 0 : index
    %4 = vector.load %arg7[%c0_7, %c1, %c0_8] : memref<4x10x128xf32, #tpu.memory_space<vmem>>, vector<4x8x128xf32>
    tpu.vector_store %arg7[%c0_7, %c1, %c0_8], %3 {strides = array<i32>} : memref<4x10x128xf32, #tpu.memory_space<vmem>>, vector<4x8x128xf32>,
    %c0_9 = arith.constant 0 : index
    %c0_10 = arith.constant 0 : index
    %5 = vector.load %arg3[%c0_9, %c0_10] : memref<1x128xf32, #tpu.memory_space<vmem>>, vector<1x128xf32>
    %6 = vector.shape_cast %5 : vector<1x128xf32> to vector<1x128xf32>
    %7 = vector.broadcast %6 : vector<1x128xf32> to vector<32x128xf32>
    %c0_11 = arith.constant 0 : index
    %c0_12 = arith.constant 0 : index
    %c0_13 = arith.constant 0 : index
    %8 = vector.load %arg7[%c0_11, %c0_12, %c0_13] : memref<4x10x128xf32, #tpu.memory_space<vmem>>, vector<4x8x128xf32>
    %9 = vector.shape_cast %8 : vector<4x8x128xf32> to vector<32x128xf32>
    %c0_14 = arith.constant 0 : index
    %c0_15 = arith.constant 0 : index
    %c0_16 = arith.constant 0 : index
    %10 = vector.load %arg2[%c0_14, %c0_15, %c0_16] : memref<3x128x128xf32, #tpu.memory_space<vmem>>, vector<1x128x128xf32>
    %11 = vector.shape_cast %10 : vector<1x128x128xf32> to vector<128x128xf32>
    %cst_17 = arith.constant dense<0.000000e+00> : vector<32x128xf32>
    %12 = tpu.matmul %9, %11, %cst_17 {dimension_numbers = #tpu.dot_dimension_numbers<[1], [0], [0], [1], [0, 0, 1, 1], [], []>} : vector<32x128xf32>, vector<128x128xf32>, vector<32x128xf32> -> vector<32x128xf32>
    %13 = arith.addf %7, %12 : vector<32x128xf32>
    %c0_18 = arith.constant 0 : index
    %c1_19 = arith.constant 1 : index
    %c0_20 = arith.constant 0 : index
    %14 = vector.load %arg7[%c0_18, %c1_19, %c0_20] : memref<4x10x128xf32, #tpu.memory_space<vmem>>, vector<4x8x128xf32>
    %15 = vector.shape_cast %14 : vector<4x8x128xf32> to vector<32x128xf32>
    %c1_21 = arith.constant 1 : index
    %c0_22 = arith.constant 0 : index
    %c0_23 = arith.constant 0 : index
    %16 = vector.load %arg2[%c1_21, %c0_22, %c0_23] : memref<3x128x128xf32, #tpu.memory_space<vmem>>, vector<1x128x128xf32>
    %17 = vector.shape_cast %16 : vector<1x128x128xf32> to vector<128x128xf32>
    %cst_24 = arith.constant dense<0.000000e+00> : vector<32x128xf32>
    %18 = tpu.matmul %15, %17, %cst_24 {dimension_numbers = #tpu.dot_dimension_numbers<[1], [0], [0], [1], [0, 0, 1, 1], [], []>} : vector<32x128xf32>, vector<128x128xf32>, vector<32x128xf32> -> vector<32x128xf32>
    %19 = arith.addf %13, %18 : vector<32x128xf32>
    %c0_25 = arith.constant 0 : index
    %c2 = arith.constant 2 : index
    %c0_26 = arith.constant 0 : index
    %20 = vector.load %arg7[%c0_25, %c2, %c0_26] : memref<4x10x128xf32, #tpu.memory_space<vmem>>, vector<4x8x128xf32>
    %21 = vector.shape_cast %20 : vector<4x8x128xf32> to vector<32x128xf32>
    %c2_27 = arith.constant 2 : index
    %c0_28 = arith.constant 0 : index
    %c0_29 = arith.constant 0 : index
    %22 = vector.load %arg2[%c2_27, %c0_28, %c0_29] : memref<3x128x128xf32, #tpu.memory_space<vmem>>, vector<1x128x128xf32>
    %23 = vector.shape_cast %22 : vector<1x128x128xf32> to vector<128x128xf32>
    %cst_30 = arith.constant dense<0.000000e+00> : vector<32x128xf32>
    %24 = tpu.matmul %21, %23, %cst_30 {dimension_numbers = #tpu.dot_dimension_numbers<[1], [0], [0], [1], [0, 0, 1, 1], [], []>} : vector<32x128xf32>, vector<128x128xf32>, vector<32x128xf32> -> vector<32x128xf32>
    %25 = arith.addf %19, %24 : vector<32x128xf32>
    %cst_31 = arith.constant 0.000000e+00 : f32
    %26 = vector.broadcast %cst_31 : f32 to vector<32x128xf32>
    %27 = arith.maximumf %25, %26 : vector<32x128xf32>
    %28 = vector.shape_cast %27 : vector<32x128xf32> to vector<4x8x128xf32>
    %c0_32 = arith.constant 0 : index
    %c1_33 = arith.constant 1 : index
    %c0_34 = arith.constant 0 : index
    %29 = vector.load %arg7[%c0_32, %c1_33, %c0_34] : memref<4x10x128xf32, #tpu.memory_space<vmem>>, vector<4x8x128xf32>
    tpu.vector_store %arg7[%c0_32, %c1_33, %c0_34], %28 {strides = array<i32>} : memref<4x10x128xf32, #tpu.memory_space<vmem>>, vector<4x8x128xf32>,
    %c0_35 = arith.constant 0 : index
    %c0_36 = arith.constant 0 : index
    %30 = vector.load %arg5[%c0_35, %c0_36] : memref<1x128xf32, #tpu.memory_space<vmem>>, vector<1x128xf32>
    %31 = vector.shape_cast %30 : vector<1x128xf32> to vector<1x128xf32>
    %32 = vector.broadcast %31 : vector<1x128xf32> to vector<32x128xf32>
    %c0_37 = arith.constant 0 : index
    %c0_38 = arith.constant 0 : index
    %c0_39 = arith.constant 0 : index
    %33 = vector.load %arg7[%c0_37, %c0_38, %c0_39] : memref<4x10x128xf32, #tpu.memory_space<vmem>>, vector<4x8x128xf32>
    %34 = vector.shape_cast %33 : vector<4x8x128xf32> to vector<32x128xf32>
    %c0_40 = arith.constant 0 : index
    %c0_41 = arith.constant 0 : index
    %c0_42 = arith.constant 0 : index
    %35 = vector.load %arg4[%c0_40, %c0_41, %c0_42] : memref<3x128x128xf32, #tpu.memory_space<vmem>>, vector<1x128x128xf32>
    %36 = vector.shape_cast %35 : vector<1x128x128xf32> to vector<128x128xf32>
    %cst_43 = arith.constant dense<0.000000e+00> : vector<32x128xf32>
    %37 = tpu.matmul %34, %36, %cst_43 {dimension_numbers = #tpu.dot_dimension_numbers<[1], [0], [0], [1], [0, 0, 1, 1], [], []>} : vector<32x128xf32>, vector<128x128xf32>, vector<32x128xf32> -> vector<32x128xf32>
    %38 = arith.addf %32, %37 : vector<32x128xf32>
    %c0_44 = arith.constant 0 : index
    %c1_45 = arith.constant 1 : index
    %c0_46 = arith.constant 0 : index
    %39 = vector.load %arg7[%c0_44, %c1_45, %c0_46] : memref<4x10x128xf32, #tpu.memory_space<vmem>>, vector<4x8x128xf32>
    %40 = vector.shape_cast %39 : vector<4x8x128xf32> to vector<32x128xf32>
    %c1_47 = arith.constant 1 : index
    %c0_48 = arith.constant 0 : index
    %c0_49 = arith.constant 0 : index
    %41 = vector.load %arg4[%c1_47, %c0_48, %c0_49] : memref<3x128x128xf32, #tpu.memory_space<vmem>>, vector<1x128x128xf32>
    %42 = vector.shape_cast %41 : vector<1x128x128xf32> to vector<128x128xf32>
    %cst_50 = arith.constant dense<0.000000e+00> : vector<32x128xf32>
    %43 = tpu.matmul %40, %42, %cst_50 {dimension_numbers = #tpu.dot_dimension_numbers<[1], [0], [0], [1], [0, 0, 1, 1], [], []>} : vector<32x128xf32>, vector<128x128xf32>, vector<32x128xf32> -> vector<32x128xf32>
    %44 = arith.addf %38, %43 : vector<32x128xf32>
    %c0_51 = arith.constant 0 : index
    %c2_52 = arith.constant 2 : index
    %c0_53 = arith.constant 0 : index
    %45 = vector.load %arg7[%c0_51, %c2_52, %c0_53] : memref<4x10x128xf32, #tpu.memory_space<vmem>>, vector<4x8x128xf32>
    %46 = vector.shape_cast %45 : vector<4x8x128xf32> to vector<32x128xf32>
    %c2_54 = arith.constant 2 : index
    %c0_55 = arith.constant 0 : index
    %c0_56 = arith.constant 0 : index
    %47 = vector.load %arg4[%c2_54, %c0_55, %c0_56] : memref<3x128x128xf32, #tpu.memory_space<vmem>>, vector<1x128x128xf32>
    %48 = vector.shape_cast %47 : vector<1x128x128xf32> to vector<128x128xf32>
    %cst_57 = arith.constant dense<0.000000e+00> : vector<32x128xf32>
    %49 = tpu.matmul %46, %48, %cst_57 {dimension_numbers = #tpu.dot_dimension_numbers<[1], [0], [0], [1], [0, 0, 1, 1], [], []>} : vector<32x128xf32>, vector<128x128xf32>, vector<32x128xf32> -> vector<32x128xf32>
    %50 = arith.addf %44, %49 : vector<32x128xf32>
    %c0_58 = arith.constant 0 : index
    %c0_59 = arith.constant 0 : index
    %c0_60 = arith.constant 0 : index
    %51 = vector.load %arg1[%c0_58, %c0_59, %c0_60] : memref<4x8x128xf32, #tpu.memory_space<vmem>>, vector<4x8x128xf32>
    %52 = vector.shape_cast %51 : vector<4x8x128xf32> to vector<32x128xf32>
    %53 = arith.addf %50, %52 : vector<32x128xf32>
    %cst_61 = arith.constant 0.000000e+00 : f32
    %54 = vector.broadcast %cst_61 : f32 to vector<32x128xf32>
    %55 = arith.maximumf %53, %54 : vector<32x128xf32>
    %56 = vector.shape_cast %55 : vector<32x128xf32> to vector<4x8x128xf32>
    %c0_62 = arith.constant 0 : index
    %c0_63 = arith.constant 0 : index
    %c0_64 = arith.constant 0 : index
    %57 = vector.load %arg6[%c0_62, %c0_63, %c0_64] : memref<4x8x128xf32, #tpu.memory_space<vmem>>, vector<4x8x128xf32>
    tpu.vector_store %arg6[%c0_62, %c0_63, %c0_64], %56 {strides = array<i32>} : memref<4x8x128xf32, #tpu.memory_space<vmem>>, vector<4x8x128xf32>,
    return
  }
  func.func @transform_0(%arg0: i32) -> (i32, i32, i32) {
    %c0_i32 = arith.constant 0 : i32
    %c0_i32_0 = arith.constant 0 : i32
    %c0_i32_1 = arith.constant 0 : i32
    return %arg0, %c0_i32, %c0_i32_0 : i32, i32, i32
  }
  func.func @transform_1(%arg0: i32) -> (i32, i32, i32) {
    %c0_i32 = arith.constant 0 : i32
    %c0_i32_0 = arith.constant 0 : i32
    %c0_i32_1 = arith.constant 0 : i32
    %c0_i32_2 = arith.constant 0 : i32
    return %c0_i32, %c0_i32_0, %c0_i32_1 : i32, i32, i32
  }
  func.func @transform_2(%arg0: i32) -> (i32, i32) {
    %c0_i32 = arith.constant 0 : i32
    %c0_i32_0 = arith.constant 0 : i32
    %c0_i32_1 = arith.constant 0 : i32
    return %c0_i32, %c0_i32_0 : i32, i32
  }
  func.func @transform_3(%arg0: i32) -> (i32, i32, i32) {
    %c0_i32 = arith.constant 0 : i32
    %c0_i32_0 = arith.constant 0 : i32
    %c0_i32_1 = arith.constant 0 : i32
    %c0_i32_2 = arith.constant 0 : i32
    return %c0_i32, %c0_i32_0, %c0_i32_1 : i32, i32, i32
  }
  func.func @transform_4(%arg0: i32) -> (i32, i32) {
    %c0_i32 = arith.constant 0 : i32
    %c0_i32_0 = arith.constant 0 : i32
    %c0_i32_1 = arith.constant 0 : i32
    return %c0_i32, %c0_i32_0 : i32, i32
  }
  func.func @transform_5(%arg0: i32) -> (i32, i32, i32) {
    %c0_i32 = arith.constant 0 : i32
    %c0_i32_0 = arith.constant 0 : i32
    %c0_i32_1 = arith.constant 0 : i32
    return %arg0, %c0_i32, %c0_i32_0 : i32, i32, i32
  }
}

</mosaic_0001>

<llo_original>
// kernel: tpu_custom_call.1
$region0: #{tpu_custom_call.1}
  #allocation0 [shape = 'u32[]', space=smem, size = 0x4, offset = 0x4, fixed_abs, tag = 'smem constant byte address 0x4 - core index']
  #allocation1 [shape = 'u32[144,128]{1,0:T(1,128)}', space=vmem, size = 0x12000, scoped, tag = 'internal scratch']
  #allocation2 [shape = 'f32[4,10,128]{2,1,0:T(8,128)}', space=vmem, size = 0x8000, scoped, tag = 'scratch operand']
  %s0 = inlined_call_operand.hbm [shape: f32[4,8,128], index: 0, kind: input, shape index: {}]
  %s1 = inlined_call_operand.hbm [shape: f32[3,128,128], index: 1, kind: input, shape index: {}]
  %s2 = inlined_call_operand.vmem [shape: f32[1,128], index: 2, kind: input, shape index: {}]
  %s3 = inlined_call_operand.hbm [shape: f32[3,128,128], index: 3, kind: input, shape index: {}]
  %s4 = inlined_call_operand.vmem [shape: f32[1,128], index: 4, kind: input, shape index: {}]
  %s5 = inlined_call_operand.hbm [shape: f32[4,8,128], index: 5, kind: output, shape index: {}]
  %s6 = sld [smem:[#allocation0]]
  $region42: #{tpu_custom_call.1} parent=0
    _
  %s8 = ssub.s32 1, %s6
  %s9 = scalar_select 0, %s8, %s6
  $region1: #{tpu_custom_call.1} parent=0
    #allocation3 [shape = 'u8[16384]{0}', space=vmem, size = 0x4000, scoped, tag = 'input window, operand 0, single buffered']
    #allocation4 [shape = 's32[1]{0}', space=sflag, size = 0x4, scoped, tag = 'scoped memory for tpu_custom_call.1']
    #allocation5 [shape = 's32[1]{0}', space=sflag, size = 0x4, scoped, tag = 'scoped memory for tpu_custom_call.1']
    #allocation6 [shape = 'u8[196608]{0}', space=vmem, size = 0x30000, scoped, tag = 'input window, operand 1, single buffered']
    #allocation7 [shape = 's32[1]{0}', space=sflag, size = 0x4, scoped, tag = 'scoped memory for tpu_custom_call.1']
    #allocation8 [shape = 'u8[196608]{0}', space=vmem, size = 0x30000, scoped, tag = 'input window, operand 3, single buffered']
    #allocation9 [shape = 'u8[16384]{0}', space=vmem, size = 0x4000, scoped, tag = 'output window, operand 0, single buffered']
    %10 = vsyncpa [#allocation4], 0
    %11 = vsyncpa [#allocation7], 0
    %12 = vsyncpa [#allocation5], 0
    // Predicated region
    $region2: #{tpu_custom_call.1} parent=1 // pred_check
      _
    $region3: #{tpu_custom_call.1} parent=1 // pred_check_branch
      %14 = sbr.rel (0) target = $region5
    $region4: #{tpu_custom_call.1} parent=1 // pred_region
      %s16 = ssub.s32 512, 512
      %17 = vsyncadd [#allocation4], %s16
      %s18 = sshll.u32 [#allocation3], 4
      %s19 = int_to_ptr.vmem [resolvable:$true] %s18
      %24 = dma.hbm_to_vmem [thread:$0]  %s0, 512, %s19, [#allocation4], 128, 128, 8
    $region5: #{tpu_custom_call.1} parent=1 // pred_fallthru
      _
    // Predicated region
    $region6: #{tpu_custom_call.1} parent=1 // pred_check
      _
    $region7: #{tpu_custom_call.1} parent=1 // pred_check_branch
      %26 = sbr.rel (0) target = $region9
    $region8: #{tpu_custom_call.1} parent=1 // pred_region
      %s28 = ssub.s32 6144, 6144
      %29 = vsyncadd [#allocation7], %s28
      %s30 = sshll.u32 [#allocation6], 4
      %s31 = int_to_ptr.vmem [resolvable:$true] %s30
      %36 = dma.hbm_to_vmem [thread:$0]  %s1, 6144, %s31, [#allocation7], 128, 128, 8
    $region9: #{tpu_custom_call.1} parent=1 // pred_fallthru
      _
    // Predicated region
    $region10: #{tpu_custom_call.1} parent=1 // pred_check
      _
    $region11: #{tpu_custom_call.1} parent=1 // pred_check_branch
      %38 = sbr.rel (0) target = $region13
    $region12: #{tpu_custom_call.1} parent=1 // pred_region
      _
    $region13: #{tpu_custom_call.1} parent=1 // pred_fallthru
      _
    // Predicated region
    $region14: #{tpu_custom_call.1} parent=1 // pred_check
      _
    $region15: #{tpu_custom_call.1} parent=1 // pred_check_branch
      %40 = sbr.rel (0) target = $region17
    $region16: #{tpu_custom_call.1} parent=1 // pred_region
      %s42 = ssub.s32 6144, 6144
      %43 = vsyncadd [#allocation7], %s42
      %s44 = sshll.u32 [#allocation8], 4
      %s45 = int_to_ptr.vmem [resolvable:$true] %s44
      %50 = dma.hbm_to_vmem [thread:$0]  %s3, 6144, %s45, [#allocation7], 128, 128, 8
    $region17: #{tpu_custom_call.1} parent=1 // pred_fallthru
      _
    // Predicated region
    $region18: #{tpu_custom_call.1} parent=1 // pred_check
      _
    $region19: #{tpu_custom_call.1} parent=1 // pred_check_branch
      %52 = sbr.rel (0) target = $region21
    $region20: #{tpu_custom_call.1} parent=1 // pred_region
      _
    $region21: #{tpu_custom_call.1} parent=1 // pred_fallthru
      _
    // Predicated region
    $region22: #{tpu_custom_call.1} parent=1 // pred_check
      _
    $region23: #{tpu_custom_call.1} parent=1 // pred_check_branch
      %54 = sbr.rel (0) target = $region25
    $region24: #{tpu_custom_call.1} parent=1 // pred_region
      %55 = dma.done [#allocation4], 512
    $region25: #{tpu_custom_call.1} parent=1 // pred_fallthru
      _
    // Predicated region
    $region26: #{tpu_custom_call.1} parent=1 // pred_check
      _
    $region27: #{tpu_custom_call.1} parent=1 // pred_check_branch
      %57 = sbr.rel (0) target = $region29
    $region28: #{tpu_custom_call.1} parent=1 // pred_region
      %58 = dma.done [#allocation7], 6144
    $region29: #{tpu_custom_call.1} parent=1 // pred_fallthru
      _
    // Predicated region
    $region30: #{tpu_custom_call.1} parent=1 // pred_check
      _
    $region31: #{tpu_custom_call.1} parent=1 // pred_check_branch
      %60 = sbr.rel (0) target = $region33
    $region32: #{tpu_custom_call.1} parent=1 // pred_region
      %61 = dma.done [#allocation7], 6144
    $region33: #{tpu_custom_call.1} parent=1 // pred_fallthru
      _
    %62 = vst [vmem:[#allocation2] sm:$0x1] 0.0
    %63 = vst [vmem:[#allocation2 + $0x10] sm:$0x1] 0.0
    %64 = vst [vmem:[#allocation2 + $0x20] sm:$0x1] 0.0
    %65 = vst [vmem:[#allocation2 + $0x30] sm:$0x1] 0.0
    %66 = vst [vmem:[#allocation2 + $0x9] sm:$0x1] 0.0
    %67 = vst [vmem:[#allocation2 + $0x19] sm:$0x1] 0.0
    %68 = vst [vmem:[#allocation2 + $0x29] sm:$0x1] 0.0
    %69 = vst [vmem:[#allocation2 + $0x39] sm:$0x1] 0.0
    %v70 = vld [vmem:[#allocation3] sm:$0xff]
    %v71 = vld [vmem:[#allocation3 + $0x8] sm:$0xff]
    %v72 = vld [vmem:[#allocation3 + $0x10] sm:$0xff]
    %v73 = vld [vmem:[#allocation3 + $0x18] sm:$0xff]
    %74 = vst [vmem:[#allocation2 + $0x1] sm:$0xff] %v70
    %75 = vst [vmem:[#allocation2 + $0x11] sm:$0xff] %v71
    %76 = vst [vmem:[#allocation2 + $0x21] sm:$0xff] %v72
    %77 = vst [vmem:[#allocation2 + $0x31] sm:$0xff] %v73
    %v78 = vld [vmem:[%s2] sm:$0x1]
    %v80 = vlaneseq
    %v81 = vshrl.u32 %v80, 7
    %v82 = vsub.s32 0, %v81
    %v83 = vrot.slane %v78, %v82
    %v85 = vld [vmem:[#allocation2] sm:$0xff]
    %v86 = vld [vmem:[#allocation2 + $0x10] sm:$0xff]
    %v87 = vld [vmem:[#allocation2 + $0x20] sm:$0xff]
    %v88 = vld [vmem:[#allocation2 + $0x30] sm:$0xff]
    %v89 = vld [vmem:[#allocation6] sm:$0xff]
    %v90 = vld [vmem:[#allocation6 + $0x8] sm:$0xff]
    %v91 = vld [vmem:[#allocation6 + $0x10] sm:$0xff]
    %v92 = vld [vmem:[#allocation6 + $0x18] sm:$0xff]
    %v93 = vld [vmem:[#allocation6 + $0x20] sm:$0xff]
    %v94 = vld [vmem:[#allocation6 + $0x28] sm:$0xff]
    %v95 = vld [vmem:[#allocation6 + $0x30] sm:$0xff]
    %v96 = vld [vmem:[#allocation6 + $0x38] sm:$0xff]
    %v97 = vld [vmem:[#allocation6 + $0x40] sm:$0xff]
    %v98 = vld [vmem:[#allocation6 + $0x48] sm:$0xff]
    %v99 = vld [vmem:[#allocation6 + $0x50] sm:$0xff]
    %v100 = vld [vmem:[#allocation6 + $0x58] sm:$0xff]
    %v101 = vld [vmem:[#allocation6 + $0x60] sm:$0xff]
    %v102 = vld [vmem:[#allocation6 + $0x68] sm:$0xff]
    %v103 = vld [vmem:[#allocation6 + $0x70] sm:$0xff]
    %v104 = vld [vmem:[#allocation6 + $0x78] sm:$0xff]
    %105 = vmatprep.subr.mxu0 0.0
    %106 = vmatpush1.msra.mxu0 %v104
    %107 = vmatprep.subr.mxu0 0.0
    %108 = vmatpush1.msra.mxu0 %v103
    %109 = vmatprep.subr.mxu0 0.0
    %110 = vmatpush1.msra.mxu0 %v102
    %111 = vmatprep.subr.mxu0 0.0
    %112 = vmatpush1.msra.mxu0 %v101
    %113 = vmatprep.subr.mxu0 0.0
    %114 = vmatpush1.msra.mxu0 %v100
    %115 = vmatprep.subr.mxu0 0.0
    %116 = vmatpush1.msra.mxu0 %v99
    %117 = vmatprep.subr.mxu0 0.0
    %118 = vmatpush1.msra.mxu0 %v98
    %119 = vmatprep.subr.mxu0 0.0
    %120 = vmatpush1.msra.mxu0 %v97
    %121 = vmatprep.subr.mxu0 0.0
    %122 = vmatpush1.msra.mxu0 %v96
    %123 = vmatprep.subr.mxu0 0.0
    %124 = vmatpush1.msra.mxu0 %v95
    %125 = vmatprep.subr.mxu0 0.0
    %126 = vmatpush1.msra.mxu0 %v94
    %127 = vmatprep.subr.mxu0 0.0
    %128 = vmatpush1.msra.mxu0 %v93
    %129 = vmatprep.subr.mxu0 0.0
    %130 = vmatpush1.msra.mxu0 %v92
    %131 = vmatprep.subr.mxu0 0.0
    %132 = vmatpush1.msra.mxu0 %v91
    %133 = vmatprep.subr.mxu0 0.0
    %134 = vmatpush1.msra.mxu0 %v90
    %135 = vmatprep.subr.mxu0 0.0
    %136 = vmatpush1.msra.mxu0 %v89
    %137 = vmatprep.subr.mxu0 0.0
    %138 = vmatpush2.msra.mxu0 0.0
    %139 = vmatprep.subr.mxu0 0.0
    %140 = vmatpush2.msra.mxu0 0.0
    %141 = vmatprep.subr.mxu0 0.0
    %142 = vmatpush2.msra.mxu0 0.0
    %143 = vmatprep.subr.mxu0 0.0
    %144 = vmatpush2.msra.mxu0 0.0
    %145 = vmatprep.subr.mxu0 0.0
    %146 = vmatpush2.msra.mxu0 0.0
    %147 = vmatprep.subr.mxu0 0.0
    %148 = vmatpush2.msra.mxu0 0.0
    %149 = vmatprep.subr.mxu0 0.0
    %150 = vmatpush2.msra.mxu0 0.0
    %151 = vmatprep.subr.mxu0 0.0
    %152 = vmatpush2.msra.mxu0 0.0
    %153 = vmatprep.subr.mxu0 0.0
    %154 = vmatpush2.msra.mxu0 0.0
    %155 = vmatprep.subr.mxu0 0.0
    %156 = vmatpush2.msra.mxu0 0.0
    %157 = vmatprep.subr.mxu0 0.0
    %158 = vmatpush2.msra.mxu0 0.0
    %159 = vmatprep.subr.mxu0 0.0
    %160 = vmatpush2.msra.mxu0 0.0
    %161 = vmatprep.subr.mxu0 0.0
    %162 = vmatpush2.msra.mxu0 0.0
    %163 = vmatprep.subr.mxu0 0.0
    %164 = vmatpush2.msra.mxu0 0.0
    %165 = vmatprep.subr.mxu0 0.0
    %166 = vmatpush2.msra.mxu0 0.0
    %167 = vmatprep.subr.mxu0 0.0
    %168 = vmatpush2.msra.mxu0 0.0
    %169 = vmatprep.mubr.f32.mxu0 0.0
    %170 = vmatmul.mubr.f32.gmra.mxu0 %v85
    %v171 = vpop.f32.mrf.mxu0
    %v172 = vadd.f32 0.0, %v171
    %v173 = vpop.f32.mrf.mxu0
    %174 = vmatprep.mubr.f32.mxu0 0.0
    %175 = vmatmul.mubr.f32.gmra.mxu0 %v86
    %v176 = vpop.f32.mrf.mxu0
    %v177 = vadd.f32 0.0, %v176
    %v178 = vpop.f32.mrf.mxu0
    %179 = vmatprep.mubr.f32.mxu0 0.0
    %180 = vmatmul.mubr.f32.gmra.mxu0 %v87
    %v181 = vpop.f32.mrf.mxu0
    %v182 = vadd.f32 0.0, %v181
    %v183 = vpop.f32.mrf.mxu0
    %184 = vmatprep.mubr.f32.mxu0 0.0
    %185 = vmatmul.mubr.f32.gmra.mxu0 %v88
    %v186 = vpop.f32.mrf.mxu0
    %v187 = vadd.f32 0.0, %v186
    %v188 = vpop.f32.mrf.mxu0
    %189 = vdwg.mxu0
    %v190 = vadd.f32 %v83, %v172
    %v191 = vadd.f32 %v83, %v177
    %v192 = vadd.f32 %v83, %v182
    %v193 = vadd.f32 %v83, %v187
    %v194 = vld [vmem:[#allocation2 + $0x1] sm:$0xff]
    %v195 = vld [vmem:[#allocation2 + $0x11] sm:$0xff]
    %v196 = vld [vmem:[#allocation2 + $0x21] sm:$0xff]
    %v197 = vld [vmem:[#allocation2 + $0x31] sm:$0xff]
    %s198 = scalar_lea.vmem [#allocation6], 128
    %v199 = vld [vmem:[%s198] sm:$0xff]
    %v200 = vld [vmem:[%s198 + $0x8] sm:$0xff]
    %v201 = vld [vmem:[%s198 + $0x10] sm:$0xff]
    %v202 = vld [vmem:[%s198 + $0x18] sm:$0xff]
    %v203 = vld [vmem:[%s198 + $0x20] sm:$0xff]
    %v204 = vld [vmem:[%s198 + $0x28] sm:$0xff]
    %v205 = vld [vmem:[%s198 + $0x30] sm:$0xff]
    %v206 = vld [vmem:[%s198 + $0x38] sm:$0xff]
    %v207 = vld [vmem:[%s198 + $0x40] sm:$0xff]
    %v208 = vld [vmem:[%s198 + $0x48] sm:$0xff]
    %v209 = vld [vmem:[%s198 + $0x50] sm:$0xff]
    %v210 = vld [vmem:[%s198 + $0x58] sm:$0xff]
    %v211 = vld [vmem:[%s198 + $0x60] sm:$0xff]
    %v212 = vld [vmem:[%s198 + $0x68] sm:$0xff]
    %v213 = vld [vmem:[%s198 + $0x70] sm:$0xff]
    %v214 = vld [vmem:[%s198 + $0x78] sm:$0xff]
    %215 = vmatprep.subr.mxu0 0.0
    %216 = vmatpush1.msra.mxu0 %v214
    %217 = vmatprep.subr.mxu0 0.0
    %218 = vmatpush1.msra.mxu0 %v213
    %219 = vmatprep.subr.mxu0 0.0
    %220 = vmatpush1.msra.mxu0 %v212
    %221 = vmatprep.subr.mxu0 0.0
    %222 = vmatpush1.msra.mxu0 %v211
    %223 = vmatprep.subr.mxu0 0.0
    %224 = vmatpush1.msra.mxu0 %v210
    %225 = vmatprep.subr.mxu0 0.0
    %226 = vmatpush1.msra.mxu0 %v209
    %227 = vmatprep.subr.mxu0 0.0
    %228 = vmatpush1.msra.mxu0 %v208
    %229 = vmatprep.subr.mxu0 0.0
    %230 = vmatpush1.msra.mxu0 %v207
    %231 = vmatprep.subr.mxu0 0.0
    %232 = vmatpush1.msra.mxu0 %v206
    %233 = vmatprep.subr.mxu0 0.0
    %234 = vmatpush1.msra.mxu0 %v205
    %235 = vmatprep.subr.mxu0 0.0
    %236 = vmatpush1.msra.mxu0 %v204
    %237 = vmatprep.subr.mxu0 0.0
    %238 = vmatpush1.msra.mxu0 %v203
    %239 = vmatprep.subr.mxu0 0.0
    %240 = vmatpush1.msra.mxu0 %v202
    %241 = vmatprep.subr.mxu0 0.0
    %242 = vmatpush1.msra.mxu0 %v201
    %243 = vmatprep.subr.mxu0 0.0
    %244 = vmatpush1.msra.mxu0 %v200
    %245 = vmatprep.subr.mxu0 0.0
    %246 = vmatpush1.msra.mxu0 %v199
    %247 = vmatprep.subr.mxu0 0.0
    %248 = vmatpush2.msra.mxu0 0.0
    %249 = vmatprep.subr.mxu0 0.0
    %250 = vmatpush2.msra.mxu0 0.0
    %251 = vmatprep.subr.mxu0 0.0
    %252 = vmatpush2.msra.mxu0 0.0
    %253 = vmatprep.subr.mxu0 0.0
    %254 = vmatpush2.msra.mxu0 0.0
    %255 = vmatprep.subr.mxu0 0.0
    %256 = vmatpush2.msra.mxu0 0.0
    %257 = vmatprep.subr.mxu0 0.0
    %258 = vmatpush2.msra.mxu0 0.0
    %259 = vmatprep.subr.mxu0 0.0
    %260 = vmatpush2.msra.mxu0 0.0
    %261 = vmatprep.subr.mxu0 0.0
    %262 = vmatpush2.msra.mxu0 0.0
    %263 = vmatprep.subr.mxu0 0.0
    %264 = vmatpush2.msra.mxu0 0.0
    %265 = vmatprep.subr.mxu0 0.0
    %266 = vmatpush2.msra.mxu0 0.0
    %267 = vmatprep.subr.mxu0 0.0
    %268 = vmatpush2.msra.mxu0 0.0
    %269 = vmatprep.subr.mxu0 0.0
    %270 = vmatpush2.msra.mxu0 0.0
    %271 = vmatprep.subr.mxu0 0.0
    %272 = vmatpush2.msra.mxu0 0.0
    %273 = vmatprep.subr.mxu0 0.0
    %274 = vmatpush2.msra.mxu0 0.0
    %275 = vmatprep.subr.mxu0 0.0
    %276 = vmatpush2.msra.mxu0 0.0
    %277 = vmatprep.subr.mxu0 0.0
    %278 = vmatpush2.msra.mxu0 0.0
    %279 = vmatprep.mubr.f32.mxu0 0.0
    %280 = vmatmul.mubr.f32.gmra.mxu0 %v194
    %v281 = vpop.f32.mrf.mxu0
    %v282 = vadd.f32 0.0, %v281
    %v283 = vpop.f32.mrf.mxu0
    %284 = vmatprep.mubr.f32.mxu0 0.0
    %285 = vmatmul.mubr.f32.gmra.mxu0 %v195
    %v286 = vpop.f32.mrf.mxu0
    %v287 = vadd.f32 0.0, %v286
    %v288 = vpop.f32.mrf.mxu0
    %289 = vmatprep.mubr.f32.mxu0 0.0
    %290 = vmatmul.mubr.f32.gmra.mxu0 %v196
    %v291 = vpop.f32.mrf.mxu0
    %v292 = vadd.f32 0.0, %v291
    %v293 = vpop.f32.mrf.mxu0
    %294 = vmatprep.mubr.f32.mxu0 0.0
    %295 = vmatmul.mubr.f32.gmra.mxu0 %v197
    %v296 = vpop.f32.mrf.mxu0
    %v297 = vadd.f32 0.0, %v296
    %v298 = vpop.f32.mrf.mxu0
    %299 = vdwg.mxu0
    %v300 = vadd.f32 %v190, %v282
    %v301 = vadd.f32 %v191, %v287
    %v302 = vadd.f32 %v192, %v292
    %v303 = vadd.f32 %v193, %v297
    %v304 = vld [vmem:[#allocation2 + $0x2] sm:$0xff]
    %v305 = vld [vmem:[#allocation2 + $0x12] sm:$0xff]
    %v306 = vld [vmem:[#allocation2 + $0x22] sm:$0xff]
    %v307 = vld [vmem:[#allocation2 + $0x32] sm:$0xff]
    %s308 = scalar_lea.vmem [#allocation6], 256
    %v309 = vld [vmem:[%s308] sm:$0xff]
    %v310 = vld [vmem:[%s308 + $0x8] sm:$0xff]
    %v311 = vld [vmem:[%s308 + $0x10] sm:$0xff]
    %v312 = vld [vmem:[%s308 + $0x18] sm:$0xff]
    %v313 = vld [vmem:[%s308 + $0x20] sm:$0xff]
    %v314 = vld [vmem:[%s308 + $0x28] sm:$0xff]
    %v315 = vld [vmem:[%s308 + $0x30] sm:$0xff]
    %v316 = vld [vmem:[%s308 + $0x38] sm:$0xff]
    %v317 = vld [vmem:[%s308 + $0x40] sm:$0xff]
    %v318 = vld [vmem:[%s308 + $0x48] sm:$0xff]
    %v319 = vld [vmem:[%s308 + $0x50] sm:$0xff]
    %v320 = vld [vmem:[%s308 + $0x58] sm:$0xff]
    %v321 = vld [vmem:[%s308 + $0x60] sm:$0xff]
    %v322 = vld [vmem:[%s308 + $0x68] sm:$0xff]
    %v323 = vld [vmem:[%s308 + $0x70] sm:$0xff]
    %v324 = vld [vmem:[%s308 + $0x78] sm:$0xff]
    %325 = vmatprep.subr.mxu0 0.0
    %326 = vmatpush1.msra.mxu0 %v324
    %327 = vmatprep.subr.mxu0 0.0
    %328 = vmatpush1.msra.mxu0 %v323
    %329 = vmatprep.subr.mxu0 0.0
    %330 = vmatpush1.msra.mxu0 %v322
    %331 = vmatprep.subr.mxu0 0.0
    %332 = vmatpush1.msra.mxu0 %v321
    %333 = vmatprep.subr.mxu0 0.0
    %334 = vmatpush1.msra.mxu0 %v320
    %335 = vmatprep.subr.mxu0 0.0
    %336 = vmatpush1.msra.mxu0 %v319
    %337 = vmatprep.subr.mxu0 0.0
    %338 = vmatpush1.msra.mxu0 %v318
    %339 = vmatprep.subr.mxu0 0.0
    %340 = vmatpush1.msra.mxu0 %v317
    %341 = vmatprep.subr.mxu0 0.0
    %342 = vmatpush1.msra.mxu0 %v316
    %343 = vmatprep.subr.mxu0 0.0
    %344 = vmatpush1.msra.mxu0 %v315
    %345 = vmatprep.subr.mxu0 0.0
    %346 = vmatpush1.msra.mxu0 %v314
    %347 = vmatprep.subr.mxu0 0.0
    %348 = vmatpush1.msra.mxu0 %v313
    %349 = vmatprep.subr.mxu0 0.0
    %350 = vmatpush1.msra.mxu0 %v312
    %351 = vmatprep.subr.mxu0 0.0
    %352 = vmatpush1.msra.mxu0 %v311
    %353 = vmatprep.subr.mxu0 0.0
    %354 = vmatpush1.msra.mxu0 %v310
    %355 = vmatprep.subr.mxu0 0.0
    %356 = vmatpush1.msra.mxu0 %v309
    %357 = vmatprep.subr.mxu0 0.0
    %358 = vmatpush2.msra.mxu0 0.0
    %359 = vmatprep.subr.mxu0 0.0
    %360 = vmatpush2.msra.mxu0 0.0
    %361 = vmatprep.subr.mxu0 0.0
    %362 = vmatpush2.msra.mxu0 0.0
    %363 = vmatprep.subr.mxu0 0.0
    %364 = vmatpush2.msra.mxu0 0.0
    %365 = vmatprep.subr.mxu0 0.0
    %366 = vmatpush2.msra.mxu0 0.0
    %367 = vmatprep.subr.mxu0 0.0
    %368 = vmatpush2.msra.mxu0 0.0
    %369 = vmatprep.subr.mxu0 0.0
    %370 = vmatpush2.msra.mxu0 0.0
    %371 = vmatprep.subr.mxu0 0.0
    %372 = vmatpush2.msra.mxu0 0.0
    %373 = vmatprep.subr.mxu0 0.0
    %374 = vmatpush2.msra.mxu0 0.0
    %375 = vmatprep.subr.mxu0 0.0
    %376 = vmatpush2.msra.mxu0 0.0
    %377 = vmatprep.subr.mxu0 0.0
    %378 = vmatpush2.msra.mxu0 0.0
    %379 = vmatprep.subr.mxu0 0.0
    %380 = vmatpush2.msra.mxu0 0.0
    %381 = vmatprep.subr.mxu0 0.0
    %382 = vmatpush2.msra.mxu0 0.0
    %383 = vmatprep.subr.mxu0 0.0
    %384 = vmatpush2.msra.mxu0 0.0
    %385 = vmatprep.subr.mxu0 0.0
    %386 = vmatpush2.msra.mxu0 0.0
    %387 = vmatprep.subr.mxu0 0.0
    %388 = vmatpush2.msra.mxu0 0.0
    %389 = vmatprep.mubr.f32.mxu0 0.0
    %390 = vmatmul.mubr.f32.gmra.mxu0 %v304
    %v391 = vpop.f32.mrf.mxu0
    %v392 = vadd.f32 0.0, %v391
    %v393 = vpop.f32.mrf.mxu0
    %394 = vmatprep.mubr.f32.mxu0 0.0
    %395 = vmatmul.mubr.f32.gmra.mxu0 %v305
    %v396 = vpop.f32.mrf.mxu0
    %v397 = vadd.f32 0.0, %v396
    %v398 = vpop.f32.mrf.mxu0
    %399 = vmatprep.mubr.f32.mxu0 0.0
    %400 = vmatmul.mubr.f32.gmra.mxu0 %v306
    %v401 = vpop.f32.mrf.mxu0
    %v402 = vadd.f32 0.0, %v401
    %v403 = vpop.f32.mrf.mxu0
    %404 = vmatprep.mubr.f32.mxu0 0.0
    %405 = vmatmul.mubr.f32.gmra.mxu0 %v307
    %v406 = vpop.f32.mrf.mxu0
    %v407 = vadd.f32 0.0, %v406
    %v408 = vpop.f32.mrf.mxu0
    %409 = vdwg.mxu0
    %v410 = vadd.f32 %v300, %v392
    %v411 = vadd.f32 %v301, %v397
    %v412 = vadd.f32 %v302, %v402
    %v413 = vadd.f32 %v303, %v407
    %v414 = vmax.f32 %v410, 0.0
    %v415 = vmax.f32 %v411, 0.0
    %v416 = vmax.f32 %v412, 0.0
    %v417 = vmax.f32 %v413, 0.0
    %418 = vst [vmem:[#allocation2 + $0x1] sm:$0xff] %v414
    %419 = vst [vmem:[#allocation2 + $0x11] sm:$0xff] %v415
    %420 = vst [vmem:[#allocation2 + $0x21] sm:$0xff] %v416
    %421 = vst [vmem:[#allocation2 + $0x31] sm:$0xff] %v417
    %v422 = vld [vmem:[%s4] sm:$0x1]
    %v424 = vlaneseq
    %v425 = vshrl.u32 %v424, 7
    %v426 = vsub.s32 0, %v425
    %v427 = vrot.slane %v422, %v426
    %v429 = vld [vmem:[#allocation2] sm:$0xff]
    %v430 = vld [vmem:[#allocation2 + $0x10] sm:$0xff]
    %v431 = vld [vmem:[#allocation2 + $0x20] sm:$0xff]
    %v432 = vld [vmem:[#allocation2 + $0x30] sm:$0xff]
    %v433 = vld [vmem:[#allocation8] sm:$0xff]
    %v434 = vld [vmem:[#allocation8 + $0x8] sm:$0xff]
    %v435 = vld [vmem:[#allocation8 + $0x10] sm:$0xff]
    %v436 = vld [vmem:[#allocation8 + $0x18] sm:$0xff]
    %v437 = vld [vmem:[#allocation8 + $0x20] sm:$0xff]
    %v438 = vld [vmem:[#allocation8 + $0x28] sm:$0xff]
    %v439 = vld [vmem:[#allocation8 + $0x30] sm:$0xff]
    %v440 = vld [vmem:[#allocation8 + $0x38] sm:$0xff]
    %v441 = vld [vmem:[#allocation8 + $0x40] sm:$0xff]
    %v442 = vld [vmem:[#allocation8 + $0x48] sm:$0xff]
    %v443 = vld [vmem:[#allocation8 + $0x50] sm:$0xff]
    %v444 = vld [vmem:[#allocation8 + $0x58] sm:$0xff]
    %v445 = vld [vmem:[#allocation8 + $0x60] sm:$0xff]
    %v446 = vld [vmem:[#allocation8 + $0x68] sm:$0xff]
    %v447 = vld [vmem:[#allocation8 + $0x70] sm:$0xff]
    %v448 = vld [vmem:[#allocation8 + $0x78] sm:$0xff]
    %449 = vmatprep.subr.mxu0 0.0
    %450 = vmatpush1.msra.mxu0 %v448
    %451 = vmatprep.subr.mxu0 0.0
    %452 = vmatpush1.msra.mxu0 %v447
    %453 = vmatprep.subr.mxu0 0.0
    %454 = vmatpush1.msra.mxu0 %v446
    %455 = vmatprep.subr.mxu0 0.0
    %456 = vmatpush1.msra.mxu0 %v445
    %457 = vmatprep.subr.mxu0 0.0
    %458 = vmatpush1.msra.mxu0 %v444
    %459 = vmatprep.subr.mxu0 0.0
    %460 = vmatpush1.msra.mxu0 %v443
    %461 = vmatprep.subr.mxu0 0.0
    %462 = vmatpush1.msra.mxu0 %v442
    %463 = vmatprep.subr.mxu0 0.0
    %464 = vmatpush1.msra.mxu0 %v441
    %465 = vmatprep.subr.mxu0 0.0
    %466 = vmatpush1.msra.mxu0 %v440
    %467 = vmatprep.subr.mxu0 0.0
    %468 = vmatpush1.msra.mxu0 %v439
    %469 = vmatprep.subr.mxu0 0.0
    %470 = vmatpush1.msra.mxu0 %v438
    %471 = vmatprep.subr.mxu0 0.0
    %472 = vmatpush1.msra.mxu0 %v437
    %473 = vmatprep.subr.mxu0 0.0
    %474 = vmatpush1.msra.mxu0 %v436
    %475 = vmatprep.subr.mxu0 0.0
    %476 = vmatpush1.msra.mxu0 %v435
    %477 = vmatprep.subr.mxu0 0.0
    %478 = vmatpush1.msra.mxu0 %v434
    %479 = vmatprep.subr.mxu0 0.0
    %480 = vmatpush1.msra.mxu0 %v433
    %481 = vmatprep.subr.mxu0 0.0
    %482 = vmatpush2.msra.mxu0 0.0
    %483 = vmatprep.subr.mxu0 0.0
    %484 = vmatpush2.msra.mxu0 0.0
    %485 = vmatprep.subr.mxu0 0.0
    %486 = vmatpush2.msra.mxu0 0.0
    %487 = vmatprep.subr.mxu0 0.0
    %488 = vmatpush2.msra.mxu0 0.0
    %489 = vmatprep.subr.mxu0 0.0
    %490 = vmatpush2.msra.mxu0 0.0
    %491 = vmatprep.subr.mxu0 0.0
    %492 = vmatpush2.msra.mxu0 0.0
    %493 = vmatprep.subr.mxu0 0.0
    %494 = vmatpush2.msra.mxu0 0.0
    %495 = vmatprep.subr.mxu0 0.0
    %496 = vmatpush2.msra.mxu0 0.0
    %497 = vmatprep.subr.mxu0 0.0
    %498 = vmatpush2.msra.mxu0 0.0
    %499 = vmatprep.subr.mxu0 0.0
    %500 = vmatpush2.msra.mxu0 0.0
    %501 = vmatprep.subr.mxu0 0.0
    %502 = vmatpush2.msra.mxu0 0.0
    %503 = vmatprep.subr.mxu0 0.0
    %504 = vmatpush2.msra.mxu0 0.0
    %505 = vmatprep.subr.mxu0 0.0
    %506 = vmatpush2.msra.mxu0 0.0
    %507 = vmatprep.subr.mxu0 0.0
    %508 = vmatpush2.msra.mxu0 0.0
    %509 = vmatprep.subr.mxu0 0.0
    %510 = vmatpush2.msra.mxu0 0.0
    %511 = vmatprep.subr.mxu0 0.0
    %512 = vmatpush2.msra.mxu0 0.0
    %513 = vmatprep.mubr.f32.mxu0 0.0
    %514 = vmatmul.mubr.f32.gmra.mxu0 %v429
    %v515 = vpop.f32.mrf.mxu0
    %v516 = vadd.f32 0.0, %v515
    %v517 = vpop.f32.mrf.mxu0
    %518 = vmatprep.mubr.f32.mxu0 0.0
    %519 = vmatmul.mubr.f32.gmra.mxu0 %v430
    %v520 = vpop.f32.mrf.mxu0
    %v521 = vadd.f32 0.0, %v520
    %v522 = vpop.f32.mrf.mxu0
    %523 = vmatprep.mubr.f32.mxu0 0.0
    %524 = vmatmul.mubr.f32.gmra.mxu0 %v431
    %v525 = vpop.f32.mrf.mxu0
    %v526 = vadd.f32 0.0, %v525
    %v527 = vpop.f32.mrf.mxu0
    %528 = vmatprep.mubr.f32.mxu0 0.0
    %529 = vmatmul.mubr.f32.gmra.mxu0 %v432
    %v530 = vpop.f32.mrf.mxu0
    %v531 = vadd.f32 0.0, %v530
    %v532 = vpop.f32.mrf.mxu0
    %533 = vdwg.mxu0
    %v534 = vadd.f32 %v427, %v516
    %v535 = vadd.f32 %v427, %v521
    %v536 = vadd.f32 %v427, %v526
    %v537 = vadd.f32 %v427, %v531
    %v538 = vld [vmem:[#allocation2 + $0x1] sm:$0xff]
    %v539 = vld [vmem:[#allocation2 + $0x11] sm:$0xff]
    %v540 = vld [vmem:[#allocation2 + $0x21] sm:$0xff]
    %v541 = vld [vmem:[#allocation2 + $0x31] sm:$0xff]
    %s542 = scalar_lea.vmem [#allocation8], 128
    %v543 = vld [vmem:[%s542] sm:$0xff]
    %v544 = vld [vmem:[%s542 + $0x8] sm:$0xff]
    %v545 = vld [vmem:[%s542 + $0x10] sm:$0xff]
    %v546 = vld [vmem:[%s542 + $0x18] sm:$0xff]
    %v547 = vld [vmem:[%s542 + $0x20] sm:$0xff]
    %v548 = vld [vmem:[%s542 + $0x28] sm:$0xff]
    %v549 = vld [vmem:[%s542 + $0x30] sm:$0xff]
    %v550 = vld [vmem:[%s542 + $0x38] sm:$0xff]
    %v551 = vld [vmem:[%s542 + $0x40] sm:$0xff]
    %v552 = vld [vmem:[%s542 + $0x48] sm:$0xff]
    %v553 = vld [vmem:[%s542 + $0x50] sm:$0xff]
    %v554 = vld [vmem:[%s542 + $0x58] sm:$0xff]
    %v555 = vld [vmem:[%s542 + $0x60] sm:$0xff]
    %v556 = vld [vmem:[%s542 + $0x68] sm:$0xff]
    %v557 = vld [vmem:[%s542 + $0x70] sm:$0xff]
    %v558 = vld [vmem:[%s542 + $0x78] sm:$0xff]
    %559 = vmatprep.subr.mxu0 0.0
    %560 = vmatpush1.msra.mxu0 %v558
    %561 = vmatprep.subr.mxu0 0.0
    %562 = vmatpush1.msra.mxu0 %v557
    %563 = vmatprep.subr.mxu0 0.0
    %564 = vmatpush1.msra.mxu0 %v556
    %565 = vmatprep.subr.mxu0 0.0
    %566 = vmatpush1.msra.mxu0 %v555
    %567 = vmatprep.subr.mxu0 0.0
    %568 = vmatpush1.msra.mxu0 %v554
    %569 = vmatprep.subr.mxu0 0.0
    %570 = vmatpush1.msra.mxu0 %v553
    %571 = vmatprep.subr.mxu0 0.0
    %572 = vmatpush1.msra.mxu0 %v552
    %573 = vmatprep.subr.mxu0 0.0
    %574 = vmatpush1.msra.mxu0 %v551
    %575 = vmatprep.subr.mxu0 0.0
    %576 = vmatpush1.msra.mxu0 %v550
    %577 = vmatprep.subr.mxu0 0.0
    %578 = vmatpush1.msra.mxu0 %v549
    %579 = vmatprep.subr.mxu0 0.0
    %580 = vmatpush1.msra.mxu0 %v548
    %581 = vmatprep.subr.mxu0 0.0
    %582 = vmatpush1.msra.mxu0 %v547
    %583 = vmatprep.subr.mxu0 0.0
    %584 = vmatpush1.msra.mxu0 %v546
    %585 = vmatprep.subr.mxu0 0.0
    %586 = vmatpush1.msra.mxu0 %v545
    %587 = vmatprep.subr.mxu0 0.0
    %588 = vmatpush1.msra.mxu0 %v544
    %589 = vmatprep.subr.mxu0 0.0
    %590 = vmatpush1.msra.mxu0 %v543
    %591 = vmatprep.subr.mxu0 0.0
    %592 = vmatpush2.msra.mxu0 0.0
    %593 = vmatprep.subr.mxu0 0.0
    %594 = vmatpush2.msra.mxu0 0.0
    %595 = vmatprep.subr.mxu0 0.0
    %596 = vmatpush2.msra.mxu0 0.0
    %597 = vmatprep.subr.mxu0 0.0
    %598 = vmatpush2.msra.mxu0 0.0
    %599 = vmatprep.subr.mxu0 0.0
    %600 = vmatpush2.msra.mxu0 0.0
    %601 = vmatprep.subr.mxu0 0.0
    %602 = vmatpush2.msra.mxu0 0.0
    %603 = vmatprep.subr.mxu0 0.0
    %604 = vmatpush2.msra.mxu0 0.0
    %605 = vmatprep.subr.mxu0 0.0
    %606 = vmatpush2.msra.mxu0 0.0
    %607 = vmatprep.subr.mxu0 0.0
    %608 = vmatpush2.msra.mxu0 0.0
    %609 = vmatprep.subr.mxu0 0.0
    %610 = vmatpush2.msra.mxu0 0.0
    %611 = vmatprep.subr.mxu0 0.0
    %612 = vmatpush2.msra.mxu0 0.0
    %613 = vmatprep.subr.mxu0 0.0
    %614 = vmatpush2.msra.mxu0 0.0
    %615 = vmatprep.subr.mxu0 0.0
    %616 = vmatpush2.msra.mxu0 0.0
    %617 = vmatprep.subr.mxu0 0.0
    %618 = vmatpush2.msra.mxu0 0.0
    %619 = vmatprep.subr.mxu0 0.0
    %620 = vmatpush2.msra.mxu0 0.0
    %621 = vmatprep.subr.mxu0 0.0
    %622 = vmatpush2.msra.mxu0 0.0
    %623 = vmatprep.mubr.f32.mxu0 0.0
    %624 = vmatmul.mubr.f32.gmra.mxu0 %v538
    %v625 = vpop.f32.mrf.mxu0
    %v626 = vadd.f32 0.0, %v625
    %v627 = vpop.f32.mrf.mxu0
    %628 = vmatprep.mubr.f32.mxu0 0.0
    %629 = vmatmul.mubr.f32.gmra.mxu0 %v539
    %v630 = vpop.f32.mrf.mxu0
    %v631 = vadd.f32 0.0, %v630
    %v632 = vpop.f32.mrf.mxu0
    %633 = vmatprep.mubr.f32.mxu0 0.0
    %634 = vmatmul.mubr.f32.gmra.mxu0 %v540
    %v635 = vpop.f32.mrf.mxu0
    %v636 = vadd.f32 0.0, %v635
    %v637 = vpop.f32.mrf.mxu0
    %638 = vmatprep.mubr.f32.mxu0 0.0
    %639 = vmatmul.mubr.f32.gmra.mxu0 %v541
    %v640 = vpop.f32.mrf.mxu0
    %v641 = vadd.f32 0.0, %v640
    %v642 = vpop.f32.mrf.mxu0
    %643 = vdwg.mxu0
    %v644 = vadd.f32 %v534, %v626
    %v645 = vadd.f32 %v535, %v631
    %v646 = vadd.f32 %v536, %v636
    %v647 = vadd.f32 %v537, %v641
    %v648 = vld [vmem:[#allocation2 + $0x2] sm:$0xff]
    %v649 = vld [vmem:[#allocation2 + $0x12] sm:$0xff]
    %v650 = vld [vmem:[#allocation2 + $0x22] sm:$0xff]
    %v651 = vld [vmem:[#allocation2 + $0x32] sm:$0xff]
    %s652 = scalar_lea.vmem [#allocation8], 256
    %v653 = vld [vmem:[%s652] sm:$0xff]
    %v654 = vld [vmem:[%s652 + $0x8] sm:$0xff]
    %v655 = vld [vmem:[%s652 + $0x10] sm:$0xff]
    %v656 = vld [vmem:[%s652 + $0x18] sm:$0xff]
    %v657 = vld [vmem:[%s652 + $0x20] sm:$0xff]
    %v658 = vld [vmem:[%s652 + $0x28] sm:$0xff]
    %v659 = vld [vmem:[%s652 + $0x30] sm:$0xff]
    %v660 = vld [vmem:[%s652 + $0x38] sm:$0xff]
    %v661 = vld [vmem:[%s652 + $0x40] sm:$0xff]
    %v662 = vld [vmem:[%s652 + $0x48] sm:$0xff]
    %v663 = vld [vmem:[%s652 + $0x50] sm:$0xff]
    %v664 = vld [vmem:[%s652 + $0x58] sm:$0xff]
    %v665 = vld [vmem:[%s652 + $0x60] sm:$0xff]
    %v666 = vld [vmem:[%s652 + $0x68] sm:$0xff]
    %v667 = vld [vmem:[%s652 + $0x70] sm:$0xff]
    %v668 = vld [vmem:[%s652 + $0x78] sm:$0xff]
    %669 = vmatprep.subr.mxu0 0.0
    %670 = vmatpush1.msra.mxu0 %v668
    %671 = vmatprep.subr.mxu0 0.0
    %672 = vmatpush1.msra.mxu0 %v667
    %673 = vmatprep.subr.mxu0 0.0
    %674 = vmatpush1.msra.mxu0 %v666
    %675 = vmatprep.subr.mxu0 0.0
    %676 = vmatpush1.msra.mxu0 %v665
    %677 = vmatprep.subr.mxu0 0.0
    %678 = vmatpush1.msra.mxu0 %v664
    %679 = vmatprep.subr.mxu0 0.0
    %680 = vmatpush1.msra.mxu0 %v663
    %681 = vmatprep.subr.mxu0 0.0
    %682 = vmatpush1.msra.mxu0 %v662
    %683 = vmatprep.subr.mxu0 0.0
    %684 = vmatpush1.msra.mxu0 %v661
    %685 = vmatprep.subr.mxu0 0.0
    %686 = vmatpush1.msra.mxu0 %v660
    %687 = vmatprep.subr.mxu0 0.0
    %688 = vmatpush1.msra.mxu0 %v659
    %689 = vmatprep.subr.mxu0 0.0
    %690 = vmatpush1.msra.mxu0 %v658
    %691 = vmatprep.subr.mxu0 0.0
    %692 = vmatpush1.msra.mxu0 %v657
    %693 = vmatprep.subr.mxu0 0.0
    %694 = vmatpush1.msra.mxu0 %v656
    %695 = vmatprep.subr.mxu0 0.0
    %696 = vmatpush1.msra.mxu0 %v655
    %697 = vmatprep.subr.mxu0 0.0
    %698 = vmatpush1.msra.mxu0 %v654
    %699 = vmatprep.subr.mxu0 0.0
    %700 = vmatpush1.msra.mxu0 %v653
    %701 = vmatprep.subr.mxu0 0.0
    %702 = vmatpush2.msra.mxu0 0.0
    %703 = vmatprep.subr.mxu0 0.0
    %704 = vmatpush2.msra.mxu0 0.0
    %705 = vmatprep.subr.mxu0 0.0
    %706 = vmatpush2.msra.mxu0 0.0
    %707 = vmatprep.subr.mxu0 0.0
    %708 = vmatpush2.msra.mxu0 0.0
    %709 = vmatprep.subr.mxu0 0.0
    %710 = vmatpush2.msra.mxu0 0.0
    %711 = vmatprep.subr.mxu0 0.0
    %712 = vmatpush2.msra.mxu0 0.0
    %713 = vmatprep.subr.mxu0 0.0
    %714 = vmatpush2.msra.mxu0 0.0
    %715 = vmatprep.subr.mxu0 0.0
    %716 = vmatpush2.msra.mxu0 0.0
    %717 = vmatprep.subr.mxu0 0.0
    %718 = vmatpush2.msra.mxu0 0.0
    %719 = vmatprep.subr.mxu0 0.0
    %720 = vmatpush2.msra.mxu0 0.0
    %721 = vmatprep.subr.mxu0 0.0
    %722 = vmatpush2.msra.mxu0 0.0
    %723 = vmatprep.subr.mxu0 0.0
    %724 = vmatpush2.msra.mxu0 0.0
    %725 = vmatprep.subr.mxu0 0.0
    %726 = vmatpush2.msra.mxu0 0.0
    %727 = vmatprep.subr.mxu0 0.0
    %728 = vmatpush2.msra.mxu0 0.0
    %729 = vmatprep.subr.mxu0 0.0
    %730 = vmatpush2.msra.mxu0 0.0
    %731 = vmatprep.subr.mxu0 0.0
    %732 = vmatpush2.msra.mxu0 0.0
    %733 = vmatprep.mubr.f32.mxu0 0.0
    %734 = vmatmul.mubr.f32.gmra.mxu0 %v648
    %v735 = vpop.f32.mrf.mxu0
    %v736 = vadd.f32 0.0, %v735
    %v737 = vpop.f32.mrf.mxu0
    %738 = vmatprep.mubr.f32.mxu0 0.0
    %739 = vmatmul.mubr.f32.gmra.mxu0 %v649
    %v740 = vpop.f32.mrf.mxu0
    %v741 = vadd.f32 0.0, %v740
    %v742 = vpop.f32.mrf.mxu0
    %743 = vmatprep.mubr.f32.mxu0 0.0
    %744 = vmatmul.mubr.f32.gmra.mxu0 %v650
    %v745 = vpop.f32.mrf.mxu0
    %v746 = vadd.f32 0.0, %v745
    %v747 = vpop.f32.mrf.mxu0
    %748 = vmatprep.mubr.f32.mxu0 0.0
    %749 = vmatmul.mubr.f32.gmra.mxu0 %v651
    %v750 = vpop.f32.mrf.mxu0
    %v751 = vadd.f32 0.0, %v750
    %v752 = vpop.f32.mrf.mxu0
    %753 = vdwg.mxu0
    %v754 = vadd.f32 %v644, %v736
    %v755 = vadd.f32 %v645, %v741
    %v756 = vadd.f32 %v646, %v746
    %v757 = vadd.f32 %v647, %v751
    %v758 = vld [vmem:[#allocation3] sm:$0xff]
    %v759 = vld [vmem:[#allocation3 + $0x8] sm:$0xff]
    %v760 = vld [vmem:[#allocation3 + $0x10] sm:$0xff]
    %v761 = vld [vmem:[#allocation3 + $0x18] sm:$0xff]
    %v762 = vadd.f32 %v754, %v758
    %v763 = vadd.f32 %v755, %v759
    %v764 = vadd.f32 %v756, %v760
    %v765 = vadd.f32 %v757, %v761
    %v766 = vmax.f32 %v762, 0.0
    %v767 = vmax.f32 %v763, 0.0
    %v768 = vmax.f32 %v764, 0.0
    %v769 = vmax.f32 %v765, 0.0
    %770 = vst [vmem:[#allocation9] sm:$0xff] %v766
    %771 = vst [vmem:[#allocation9 + $0x8] sm:$0xff] %v767
    %772 = vst [vmem:[#allocation9 + $0x10] sm:$0xff] %v768
    %773 = vst [vmem:[#allocation9 + $0x18] sm:$0xff] %v769
    // Predicated region
    $region34: #{tpu_custom_call.1} parent=1 // pred_check
      _
    $region35: #{tpu_custom_call.1} parent=1 // pred_check_branch
      %775 = sbr.rel (0) target = $region37
    $region36: #{tpu_custom_call.1} parent=1 // pred_region
      %s777 = ssub.s32 512, 512
      %778 = vsyncadd [#allocation5], %s777
      %s779 = sshll.u32 [#allocation9], 4
      %s780 = int_to_ptr.vmem [resolvable:$true] %s779
      %785 = dma.vmem_to_hbm [thread:$0]  %s780, 512, %s5, [#allocation5], 128, 128, 8
    $region37: #{tpu_custom_call.1} parent=1 // pred_fallthru
      _
    // Predicated region
    $region38: #{tpu_custom_call.1} parent=1 // pred_check
      _
    $region39: #{tpu_custom_call.1} parent=1 // pred_check_branch
      %787 = sbr.rel (0) target = $region41
    $region40: #{tpu_custom_call.1} parent=1 // pred_region
      %788 = dma.done [#allocation5], 512
    $region41: #{tpu_custom_call.1} parent=1 // pred_fallthru
      _
    %789 = vsyncpa [#allocation4], 1
    %790 = vsyncpa [#allocation7], 1
    %791 = vsyncpa [#allocation5], 1

</llo_original>
